<compile_context>
chip_gen: v7x
topology: tpu7x:2x2x1
jax: 0.10.0
libtpu: 0.0.40
codegen_flags: <defaults>
</compile_context>

<pallas_src>
import jax
import jax.numpy as jnp
from jax.experimental import pallas as pl
from jax.experimental.pallas import tpu as pltpu


def _round_up(a, b):
    return ((a + b - 1) // b) * b


def _vmem_block_bytes(n_tile, c_block, out_block, d):
    """Rough per-step VMEM footprint: double-buffered inputs/output + f32 scratch."""
    lane = lambda v: _round_up(v, 128)
    f32 = lambda r, c: _round_up(r, 8) * lane(c) * 4
    bf16 = lambda r, c: _round_up(r, 16) * lane(c) * 2
    return (2 * f32(n_tile, d)              # x tile (f32)
            + 2 * f32(n_tile, 1)            # -||x||^2/(2s^2)
            + 2 * bf16(d, c_block)          # scaled centers^T chunk (bf16)
            + 2 * f32(1, c_block)           # -||c||^2/(2s^2)
            + 2 * bf16(c_block, out_block)  # fused weights chunk (bf16)
            + 2 * f32(1, out_block)         # summed bias
            + 2 * f32(n_tile, out_block)    # output tile (f32)
            + f32(n_tile, out_block))       # f32 accumulator scratch


def _committee_kernel(x_ref, xterm_ref, ct_ref, cterm_ref, wt_ref, bias_ref,
                      o_ref, acc_ref):
    g = pl.program_id(1)  # center-chunk (reduction) axis

    @pl.when(g == 0)
    def _():
        acc_ref[...] = jnp.zeros_like(acc_ref)

    # exp(-||x - c||^2 / (2 sigma^2))
    #   = exp( (x . c)/sigma^2 - ||x||^2/(2 sigma^2) - ||c||^2/(2 sigma^2) )
    # 1/sigma^2 is pre-folded into ct_ref (wrapper); norm terms precomputed there too.
    x = x_ref[...].astype(jnp.bfloat16)                       # bf16 MXU operand
    xc = jnp.dot(x, ct_ref[...],
                 preferred_element_type=jnp.float32)          # (Nt, Cb) f32
    arg = xc + xterm_ref[...] + cterm_ref[...]                # (Nt, Cb)
    k = jnp.exp(arg).astype(jnp.bfloat16)                     # gaussian block, bf16

    # Accumulate the fused linear layer over center chunks (f32 VMEM scratch).
    acc_ref[...] += jnp.dot(k, wt_ref[...],
                            preferred_element_type=jnp.float32)  # (Nt, out_block)

    @pl.when(g == pl.num_programs(1) - 1)
    def _():
        o_ref[...] = (acc_ref[...] + bias_ref[...]).astype(o_ref.dtype)


def klinear_committee(x, centers, weights, biases, *, sigma=1.0,
                      n_tile_max=512, vmem_budget_bytes=36 * 1024 * 1024):
    """Forward pass of a kLinearCommittee of gaussian 'indirect' kLinear experts.

    x:        (N, D)         flattened input
    centers:  (E, M, D)      centers of each expert
    weights:  (E, out, M)    torch.nn.Linear weight layout per expert
    biases:   (E, 1, out)    bias per expert
    returns:  (N, out) float32
    """
    N, D = x.shape
    E, M, _ = centers.shape
    out_features = weights.shape[1]

    inv_sigma2 = 1.0 / float(sigma) ** 2
    inv_two_sigma2 = 0.5 * inv_sigma2

    # ---- tile / padding choices -------------------------------------------
    # TODO(synk): on v7x (2 TensorCores) with tiny N but huge out_features, an extra
    # "parallel" out-feature grid axis would keep both cores busy; not needed here.
    n_tile = min(_round_up(N, 8), n_tile_max)          # batch tile (multiple of 8)

    c_total = E * M                                    # fused center axis
    c_pad = _round_up(c_total, 128)                    # lane-dense

    # Output block: lane-dense (padded to 128) when out_features >= 128; otherwise
    # keep the true dim as a full-extent block to avoid inflating streamed bytes.
    out_block = _round_up(out_features, 128) if out_features >= 128 else out_features

    def pick_c_block(nt):
        # Prefer full residency (c_block == c_pad => weights/centers DMA'd once).
        cb = c_pad
        while cb > 128 and _vmem_block_bytes(nt, cb, out_block, D) > vmem_budget_bytes:
            cb -= 128
            while c_pad % cb:
                cb -= 128
        return cb

    c_block = pick_c_block(n_tile)
    while (_vmem_block_bytes(n_tile, c_block, out_block, D) > vmem_budget_bytes
           and n_tile > 8):
        n_tile = max(8, (n_tile // 2 // 8) * 8)
        c_block = pick_c_block(n_tile)

    n_pad = _round_up(N, n_tile)

    # ---- wrapper-side layout plumbing (hoisted out of the grid loop) ------
    xf = x.astype(jnp.float32)
    x_pad = jnp.zeros((n_pad, D), jnp.float32).at[:N].set(xf)
    x_term = -jnp.sum(x_pad * x_pad, axis=-1, keepdims=True) * inv_two_sigma2

    c_flat = centers.reshape(E * M, D).astype(jnp.float32)          # (C, D)
    # Fold 1/sigma^2 into the transposed centers; store as bf16 MXU operand.
    c_t = (jnp.zeros((D, c_pad), jnp.float32)
           .at[:, :c_total].set((c_flat * inv_sigma2).T)
           .astype(jnp.bfloat16))
    c_term = jnp.zeros((1, c_pad), jnp.float32).at[:, :c_total].set(
        -jnp.sum(c_flat * c_flat, axis=-1) * inv_two_sigma2)

    w_flat = jnp.transpose(weights, (0, 2, 1)).reshape(E * M, out_features)
    w_t = (jnp.zeros((c_pad, out_block), jnp.float32)
           .at[:c_total, :out_features].set(w_flat.astype(jnp.float32))
           .astype(jnp.bfloat16))

    b_sum = jnp.zeros((1, out_block), jnp.float32).at[:, :out_features].set(
        jnp.sum(biases.astype(jnp.float32), axis=0).reshape(1, out_features))

    # Padded center columns: zero weight rows => contribute exactly zero.
    # Padded batch rows / output columns (if any) are sliced away after the call.

    vmem_needed = _vmem_block_bytes(n_tile, c_block, out_block, D)
    # Explicit scoped-VMEM limit: needed+headroom, floor 16 MiB, cap 48 MiB so the
    # same setting is safe on v7x (64 MiB physical) as well as v5e/v6e (128 MiB).
    vmem_limit = min(max(int(vmem_needed * 1.5) + (4 << 20), 16 << 20), 48 << 20)

    y = pl.pallas_call(
        _committee_kernel,
        out_shape=jax.ShapeDtypeStruct((n_pad, out_block), jnp.float32),
        grid_spec=pltpu.PrefetchScalarGridSpec(
            num_scalar_prefetch=0,
            grid=(n_pad // n_tile, c_pad // c_block),
            in_specs=[
                pl.BlockSpec((n_tile, D), lambda i, g: (i, 0)),         # x tile (f32)
                pl.BlockSpec((n_tile, 1), lambda i, g: (i, 0)),         # -||x||^2/(2s^2)
                pl.BlockSpec((D, c_block), lambda i, g: (0, g)),        # scaled centers^T
                pl.BlockSpec((1, c_block), lambda i, g: (0, g)),        # -||c||^2/(2s^2)
                pl.BlockSpec((c_block, out_block), lambda i, g: (g, 0)),# fused W^T chunk
                pl.BlockSpec((1, out_block), lambda i, g: (0, 0)),      # summed bias
            ],
            out_specs=pl.BlockSpec((n_tile, out_block), lambda i, g: (i, 0)),
            scratch_shapes=[pltpu.VMEM((n_tile, out_block), jnp.float32)],
        ),
        compiler_params=pltpu.CompilerParams(
            dimension_semantics=("parallel", "arbitrary"),
            vmem_limit_bytes=vmem_limit),
    )(x_pad, x_term, c_t, c_term, w_t, b_sum)

    return y[:N, :out_features]


def _reference(x, centers, weights, biases, *, sigma=1.0):
    """Pure-JAX reference: sum of gaussian 'indirect' kLinear experts (f32)."""
    E = centers.shape[0]
    out = None
    for e in range(E):
        c = centers[e]
        d2 = jnp.sum((x[:, None, :] - c[None, :, :]) ** 2, axis=-1)
        k = jnp.exp(-d2 / (2.0 * sigma ** 2))
        y = k @ weights[e].T + biases[e]
        out = y if out is None else out + y
    return out


if __name__ == "__main__":
    # Small deterministic setup consistent with a kLinearCommittee of gaussian
    # indirect kLinear experts.
    N = 8      # batch
    D = 32     # in_features (flattened)
    M = 16     # expert_size (centers per expert)
    E = 3      # n_experts
    OUT = 8    # out_features
    SIGMA = 4.0  # keeps the gaussian kernel values in a meaningful (non-tiny) range

    key = jax.random.PRNGKey(0)
    kx, kc, kw, kb = jax.random.split(key, 4)

    x = jax.random.normal(kx, (N, D), dtype=jnp.float32)
    centers = jax.random.normal(kc, (E, M, D), dtype=jnp.float32)
    weights = jax.random.normal(kw, (E, OUT, M), dtype=jnp.float32) * 0.1
    biases = jax.random.normal(kb, (E, 1, OUT), dtype=jnp.float32) * 0.1

    y = klinear_committee(x, centers, weights, biases, sigma=SIGMA)
    y = jax.block_until_ready(y)

    y_ref = _reference(x, centers, weights, biases, sigma=SIGMA)
    assert y.shape == (N, OUT)
    # bf16 MXU operands (f32 accumulation) -> looser tolerance than a pure-f32 path.
    assert jnp.allclose(y, y_ref, atol=3e-2, rtol=3e-2), "mismatch vs reference"

    print("KERNEL_OK")
</pallas_src>

<mosaic_0001>
module attributes {stable_mosaic.version = 11 : i64} {
  func.func @_committee_kernel(%arg0: i32, %arg1: i32, %arg2: memref<8x32xf32, #tpu.memory_space<vmem>>, %arg3: memref<8x1xf32, #tpu.memory_space<vmem>>, %arg4: memref<32x128xbf16, #tpu.memory_space<vmem>>, %arg5: memref<1x128xf32, #tpu.memory_space<vmem>>, %arg6: memref<128x8xbf16, #tpu.memory_space<vmem>>, %arg7: memref<1x8xf32, #tpu.memory_space<vmem>>, %arg8: memref<8x8xf32, #tpu.memory_space<vmem>>, %arg9: memref<8x8xf32, #tpu.memory_space<vmem>>) attributes {dimension_semantics = [#tpu.dimension_semantics<parallel>, #tpu.dimension_semantics<arbitrary>], iteration_bounds = array<i64: 1, 1>, scalar_prefetch = 0 : i64, scratch_operands = 1 : i64, tpu.core_type = #tpu.core_type<tc>, window_params = [{transform_indices = @transform_0, window_bounds = array<i64: 8, 32>}, {transform_indices = @transform_1, window_bounds = array<i64: 8, 1>}, {transform_indices = @transform_2, window_bounds = array<i64: 32, 128>}, {transform_indices = @transform_3, window_bounds = array<i64: 1, 128>}, {transform_indices = @transform_4, window_bounds = array<i64: 128, 8>}, {pipeline_mode = #tpu.pipeline_mode<synchronous>, transform_indices = @transform_5, window_bounds = array<i64: 1, 8>}, {transform_indices = @transform_6, window_bounds = array<i64: 8, 8>}]} {
    %c0_i32 = arith.constant 0 : i32
    %0 = arith.cmpi eq, %arg1, %c0_i32 : i32
    %1 = arith.extui %0 : i1 to i32
    %c0_i32_0 = arith.constant 0 : i32
    %2 = arith.cmpi ne, %1, %c0_i32_0 : i32
    scf.if %2 {
      %cst_17 = arith.constant 0.000000e+00 : f32
      %23 = vector.broadcast %cst_17 : f32 to vector<8x8xf32>
      %c0_18 = arith.constant 0 : index
      %c0_19 = arith.constant 0 : index
      %24 = vector.load %arg9[%c0_18, %c0_19] : memref<8x8xf32, #tpu.memory_space<vmem>>, vector<8x8xf32>
      tpu.vector_store %arg9[%c0_18, %c0_19], %23 {strides = array<i32>} : memref<8x8xf32, #tpu.memory_space<vmem>>, vector<8x8xf32>,
    } else {
    }
    %c0 = arith.constant 0 : index
    %c0_1 = arith.constant 0 : index
    %3 = vector.load %arg2[%c0, %c0_1] : memref<8x32xf32, #tpu.memory_space<vmem>>, vector<8x32xf32>
    %4 = arith.truncf %3 : vector<8x32xf32> to vector<8x32xbf16>
    %c0_2 = arith.constant 0 : index
    %c0_3 = arith.constant 0 : index
    %5 = vector.load %arg4[%c0_2, %c0_3] : memref<32x128xbf16, #tpu.memory_space<vmem>>, vector<32x128xbf16>
    %cst = arith.constant dense<0.000000e+00> : vector<8x128xf32>
    %6 = tpu.matmul %4, %5, %cst {dimension_numbers = #tpu.dot_dimension_numbers<[1], [0], [0], [1], [0, 0, 1, 1], [], []>} : vector<8x32xbf16>, vector<32x128xbf16>, vector<8x128xf32> -> vector<8x128xf32>
    %c0_4 = arith.constant 0 : index
    %c0_5 = arith.constant 0 : index
    %7 = vector.load %arg3[%c0_4, %c0_5] : memref<8x1xf32, #tpu.memory_space<vmem>>, vector<8x1xf32>
    %8 = vector.broadcast %7 : vector<8x1xf32> to vector<8x128xf32>
    %9 = arith.addf %6, %8 : vector<8x128xf32>
    %c0_6 = arith.constant 0 : index
    %c0_7 = arith.constant 0 : index
    %10 = vector.load %arg5[%c0_6, %c0_7] : memref<1x128xf32, #tpu.memory_space<vmem>>, vector<1x128xf32>
    %11 = vector.broadcast %10 : vector<1x128xf32> to vector<8x128xf32>
    %12 = arith.addf %9, %11 : vector<8x128xf32>
    %13 = math.exp %12 : vector<8x128xf32>
    %14 = arith.truncf %13 : vector<8x128xf32> to vector<8x128xbf16>
    %c0_8 = arith.constant 0 : index
    %c0_9 = arith.constant 0 : index
    %15 = vector.load %arg9[%c0_8, %c0_9] : memref<8x8xf32, #tpu.memory_space<vmem>>, vector<8x8xf32>
    %c0_10 = arith.constant 0 : index
    %c0_11 = arith.constant 0 : index
    %16 = vector.load %arg6[%c0_10, %c0_11] : memref<128x8xbf16, #tpu.memory_space<vmem>>, vector<128x8xbf16>
    %cst_12 = arith.constant dense<0.000000e+00> : vector<8x8xf32>
    %17 = tpu.matmul %14, %16, %cst_12 {dimension_numbers = #tpu.dot_dimension_numbers<[1], [0], [0], [1], [0, 0, 1, 1], [], []>} : vector<8x128xbf16>, vector<128x8xbf16>, vector<8x8xf32> -> vector<8x8xf32>
    %18 = arith.addf %15, %17 : vector<8x8xf32>
    %c0_13 = arith.constant 0 : index
    %c0_14 = arith.constant 0 : index
    %19 = vector.load %arg9[%c0_13, %c0_14] : memref<8x8xf32, #tpu.memory_space<vmem>>, vector<8x8xf32>
    tpu.vector_store %arg9[%c0_13, %c0_14], %18 {strides = array<i32>} : memref<8x8xf32, #tpu.memory_space<vmem>>, vector<8x8xf32>,
    %c0_i32_15 = arith.constant 0 : i32
    %20 = arith.cmpi eq, %arg1, %c0_i32_15 : i32
    %21 = arith.extui %20 : i1 to i32
    %c0_i32_16 = arith.constant 0 : i32
    %22 = arith.cmpi ne, %21, %c0_i32_16 : i32
    scf.if %22 {
      %c0_17 = arith.constant 0 : index
      %c0_18 = arith.constant 0 : index
      %23 = vector.load %arg9[%c0_17, %c0_18] : memref<8x8xf32, #tpu.memory_space<vmem>>, vector<8x8xf32>
      %c0_19 = arith.constant 0 : index
      %c0_20 = arith.constant 0 : index
      %24 = vector.load %arg7[%c0_19, %c0_20] : memref<1x8xf32, #tpu.memory_space<vmem>>, vector<1x8xf32>
      %25 = vector.broadcast %24 : vector<1x8xf32> to vector<8x8xf32>
      %26 = arith.addf %23, %25 : vector<8x8xf32>
      %c0_21 = arith.constant 0 : index
      %c0_22 = arith.constant 0 : index
      %27 = vector.load %arg8[%c0_21, %c0_22] : memref<8x8xf32, #tpu.memory_space<vmem>>, vector<8x8xf32>
      tpu.vector_store %arg8[%c0_21, %c0_22], %26 {strides = array<i32>} : memref<8x8xf32, #tpu.memory_space<vmem>>, vector<8x8xf32>,
    } else {
    }
    return
  }
  func.func @transform_0(%arg0: i32, %arg1: i32) -> (i32, i32) {
    %c0_i32 = arith.constant 0 : i32
    %c0_i32_0 = arith.constant 0 : i32
    return %arg0, %c0_i32 : i32, i32
  }
  func.func @transform_1(%arg0: i32, %arg1: i32) -> (i32, i32) {
    %c0_i32 = arith.constant 0 : i32
    %c0_i32_0 = arith.constant 0 : i32
    return %arg0, %c0_i32 : i32, i32
  }
  func.func @transform_2(%arg0: i32, %arg1: i32) -> (i32, i32) {
    %c0_i32 = arith.constant 0 : i32
    %c0_i32_0 = arith.constant 0 : i32
    return %c0_i32, %arg1 : i32, i32
  }
  func.func @transform_3(%arg0: i32, %arg1: i32) -> (i32, i32) {
    %c0_i32 = arith.constant 0 : i32
    %c0_i32_0 = arith.constant 0 : i32
    return %c0_i32, %arg1 : i32, i32
  }
  func.func @transform_4(%arg0: i32, %arg1: i32) -> (i32, i32) {
    %c0_i32 = arith.constant 0 : i32
    %c0_i32_0 = arith.constant 0 : i32
    return %arg1, %c0_i32 : i32, i32
  }
  func.func @transform_5(%arg0: i32, %arg1: i32) -> (i32, i32) {
    %c0_i32 = arith.constant 0 : i32
    %c0_i32_0 = arith.constant 0 : i32
    %c0_i32_1 = arith.constant 0 : i32
    return %c0_i32, %c0_i32_0 : i32, i32
  }
  func.func @transform_6(%arg0: i32, %arg1: i32) -> (i32, i32) {
    %c0_i32 = arith.constant 0 : i32
    %c0_i32_0 = arith.constant 0 : i32
    return %arg0, %c0_i32 : i32, i32
  }
}

</mosaic_0001>

<llo_original>
// kernel: tpu_custom_call.1
$region0: #{tpu_custom_call.1}
  #allocation0 [shape = 'u32[]', space=smem, size = 0x4, offset = 0x4, fixed_abs, tag = 'smem constant byte address 0x4 - core index']
  #allocation1 [shape = 'u32[144,128]{1,0:T(1,128)}', space=vmem, size = 0x12000, scoped, tag = 'internal scratch']
  #allocation2 [shape = 'f32[8,8]{1,0:T(8,128)}', space=vmem, size = 0x1000, scoped, tag = 'scratch operand']
  %s0 = inlined_call_operand.vmem [shape: f32[8,32], index: 0, kind: input, shape index: {}]
  %s1 = inlined_call_operand.vmem [shape: f32[8,1], index: 1, kind: input, shape index: {}]
  %s2 = inlined_call_operand.vmem [shape: bf16[32,128], index: 2, kind: input, shape index: {}]
  %s3 = inlined_call_operand.vmem [shape: f32[1,128], index: 3, kind: input, shape index: {}]
  %s4 = inlined_call_operand.vmem [shape: bf16[128,8], index: 4, kind: input, shape index: {}]
  %s5 = inlined_call_operand.vmem [shape: f32[1,8], index: 5, kind: input, shape index: {}]
  %s6 = inlined_call_operand.hbm [shape: f32[8,8], index: 6, kind: output, shape index: {}]
  %s7 = sld [smem:[#allocation0]]
  $region42: #{tpu_custom_call.1} parent=0
    _
  %s9 = ssub.s32 1, %s7
  %s10 = scalar_select 0, %s9, %s7
  $region1: #{tpu_custom_call.1} parent=0
    #allocation3 [shape = 'u8[4096]{0}', space=vmem, size = 0x1000, scoped, tag = 'output window, operand 0, single buffered']
    #allocation4 [shape = 's32[1]{0}', space=sflag, size = 0x4, scoped, tag = 'scoped memory for tpu_custom_call.1']
    %11 = vsyncpa [#allocation4], 0
    // Predicated region
    $region2: #{tpu_custom_call.1} parent=1 // pred_check
      _
    $region3: #{tpu_custom_call.1} parent=1 // pred_check_branch
      %13 = sbr.rel (0) target = $region5
    $region4: #{tpu_custom_call.1} parent=1 // pred_region
      _
    $region5: #{tpu_custom_call.1} parent=1 // pred_fallthru
      _
    // Predicated region
    $region6: #{tpu_custom_call.1} parent=1 // pred_check
      _
    $region7: #{tpu_custom_call.1} parent=1 // pred_check_branch
      %15 = sbr.rel (0) target = $region9
    $region8: #{tpu_custom_call.1} parent=1 // pred_region
      _
    $region9: #{tpu_custom_call.1} parent=1 // pred_fallthru
      _
    // Predicated region
    $region10: #{tpu_custom_call.1} parent=1 // pred_check
      _
    $region11: #{tpu_custom_call.1} parent=1 // pred_check_branch
      %17 = sbr.rel (0) target = $region13
    $region12: #{tpu_custom_call.1} parent=1 // pred_region
      _
    $region13: #{tpu_custom_call.1} parent=1 // pred_fallthru
      _
    // Predicated region
    $region14: #{tpu_custom_call.1} parent=1 // pred_check
      _
    $region15: #{tpu_custom_call.1} parent=1 // pred_check_branch
      %19 = sbr.rel (0) target = $region17
    $region16: #{tpu_custom_call.1} parent=1 // pred_region
      _
    $region17: #{tpu_custom_call.1} parent=1 // pred_fallthru
      _
    // Predicated region
    $region18: #{tpu_custom_call.1} parent=1 // pred_check
      _
    $region19: #{tpu_custom_call.1} parent=1 // pred_check_branch
      %21 = sbr.rel (0) target = $region21
    $region20: #{tpu_custom_call.1} parent=1 // pred_region
      _
    $region21: #{tpu_custom_call.1} parent=1 // pred_fallthru
      _
    // Predicated region
    $region22: #{tpu_custom_call.1} parent=1 // pred_check
      _
    $region23: #{tpu_custom_call.1} parent=1 // pred_check_branch
      %23 = sbr.rel (0) target = $region25
    $region24: #{tpu_custom_call.1} parent=1 // pred_region
      _
    $region25: #{tpu_custom_call.1} parent=1 // pred_fallthru
      _
    %p25 = scmp.eq.s32.totalorder 0, 0
    // Predicated region
    $region26: #{tpu_custom_call.1} parent=1 // pred_check
      %p26 = pneg %p25
    $region27: #{tpu_custom_call.1} parent=1 // pred_check_branch
      %28 = sbr.rel (%p26) target = $region29
    $region28: #{tpu_custom_call.1} parent=1 // pred_region
      %vm29 = vcmask 64512
      %30 = vst.msk [vmem:[#allocation2] sm:$0xff] %vm29, 0.0
    $region29: #{tpu_custom_call.1} parent=1 // pred_fallthru
      _
    %v31 = vld [vmem:[%s0] sm:$0xff]
    %v32 = vpack.c.bf16 %v31, %v31
    %v33 = vld [vmem:[%s2] sm:$0xf]
    %v34 = vld [vmem:[%s2 + $0x4] sm:$0xf]
    %v35 = vld [vmem:[%s2 + $0x8] sm:$0xf]
    %v36 = vld [vmem:[%s2 + $0xc] sm:$0xf]
    %v37 = vld [vmem:[%s1] sm:$0xff]
    %39 = vset.pattern.permute.xlu0 0
    %40 = vperm.xlu0 %39, %v37
    %v41 = vpop.permute.xlu0 %40
    %v47 = vunpack.c.l.b16 %v33
    %v48 = vunpack.c.l.b16 %v34
    %v49 = vunpack.c.l.b16 %v35
    %v50 = vunpack.c.l.b16 %v36
    %v51 = vpack.c.b16 %v48, %v47
    %v52 = vpack.c.b16 %v50, %v49
    %vm55 = vcmask 261120
    %v57 = vsel %vm55, %v32, 0
    %59 = vmatprep.subr.bf16.mxu0 0
    %60 = vmatpush1.bf16.msra.mxu0 %v51
    %61 = vmatprep.subr.bf16.mxu0 0
    %62 = vmatpush1.bf16.msra.mxu0 %v52
    %63 = vmatprep.subr.bf16.mxu0 0
    %64 = vmatpush1.bf16.msra.mxu0 0
    %65 = vmatprep.subr.bf16.mxu0 0
    %66 = vmatpush1.bf16.msra.mxu0 0
    %67 = vmatprep.subr.bf16.mxu0 0
    %68 = vmatpush1.bf16.msra.mxu0 0
    %69 = vmatprep.subr.bf16.mxu0 0
    %70 = vmatpush1.bf16.msra.mxu0 0
    %71 = vmatprep.subr.bf16.mxu0 0
    %72 = vmatpush1.bf16.msra.mxu0 0
    %73 = vmatprep.subr.bf16.mxu0 0
    %74 = vmatpush1.bf16.msra.mxu0 0
    %75 = vmatprep.subr.bf16.mxu0 0
    %76 = vmatpush1.bf16.msra.mxu0 0
    %77 = vmatprep.subr.bf16.mxu0 0
    %78 = vmatpush1.bf16.msra.mxu0 0
    %79 = vmatprep.subr.bf16.mxu0 0
    %80 = vmatpush1.bf16.msra.mxu0 0
    %81 = vmatprep.subr.bf16.mxu0 0
    %82 = vmatpush1.bf16.msra.mxu0 0
    %83 = vmatprep.subr.bf16.mxu0 0
    %84 = vmatpush1.bf16.msra.mxu0 0
    %85 = vmatprep.subr.bf16.mxu0 0
    %86 = vmatpush1.bf16.msra.mxu0 0
    %87 = vmatprep.subr.bf16.mxu0 0
    %88 = vmatpush1.bf16.msra.mxu0 0
    %89 = vmatprep.subr.bf16.mxu0 0
    %90 = vmatpush1.bf16.msra.mxu0 0
    %91 = vmatprep.mubr.bf16.mxu0 0
    %92 = vmatmul.mubr.bf16.gmra.mrb[0].mxu0 %v57
    %v93 = vpop.f32.mrb[0].mxu0
    %v94 = vadd.f32 %v41, %v93
    %v95 = vpop.f32.mrb[0].mxu0
    %v96 = vpop.f32.mrb[0].mxu0
    %v97 = vpop.f32.mrb[0].mxu0
    %98 = vdwg.mxu0
    %v99 = vld [vmem:[%s3] sm:$0x1]
    %v101 = vlaneseq
    %v102 = vshrl.u32 %v101, 7
    %v103 = vsub.s32 0, %v102
    %v104 = vrot.slane %v99, %v103
    %v106 = vadd.f32 %v94, %v104
    %v107 = vmul.f32 %v106, 1.442695
    %v108 = vpow.pop %v107
    %v109 = vpack.c.bf16 %v108, %v108
    %v110 = vld [vmem:[#allocation2] sm:$0xff]
    %v111 = vld [vmem:[%s4] sm:$0xf]
    %v112 = vld [vmem:[%s4 + $0x4] sm:$0xf]
    %v113 = vld [vmem:[%s4 + $0x8] sm:$0xf]
    %v114 = vld [vmem:[%s4 + $0xc] sm:$0xf]
    %v115 = vld [vmem:[%s4 + $0x10] sm:$0xf]
    %v116 = vld [vmem:[%s4 + $0x14] sm:$0xf]
    %v117 = vld [vmem:[%s4 + $0x18] sm:$0xf]
    %v118 = vld [vmem:[%s4 + $0x1c] sm:$0xf]
    %v119 = vld [vmem:[%s4 + $0x20] sm:$0xf]
    %v120 = vld [vmem:[%s4 + $0x24] sm:$0xf]
    %v121 = vld [vmem:[%s4 + $0x28] sm:$0xf]
    %v122 = vld [vmem:[%s4 + $0x2c] sm:$0xf]
    %v123 = vld [vmem:[%s4 + $0x30] sm:$0xf]
    %v124 = vld [vmem:[%s4 + $0x34] sm:$0xf]
    %v125 = vld [vmem:[%s4 + $0x38] sm:$0xf]
    %v126 = vld [vmem:[%s4 + $0x3c] sm:$0xf]
    %v143 = vunpack.c.l.b16 %v111
    %v144 = vunpack.c.l.b16 %v112
    %v145 = vunpack.c.l.b16 %v113
    %v146 = vunpack.c.l.b16 %v114
    %v147 = vunpack.c.l.b16 %v115
    %v148 = vunpack.c.l.b16 %v116
    %v149 = vunpack.c.l.b16 %v117
    %v150 = vunpack.c.l.b16 %v118
    %v151 = vunpack.c.l.b16 %v119
    %v152 = vunpack.c.l.b16 %v120
    %v153 = vunpack.c.l.b16 %v121
    %v154 = vunpack.c.l.b16 %v122
    %v155 = vunpack.c.l.b16 %v123
    %v156 = vunpack.c.l.b16 %v124
    %v157 = vunpack.c.l.b16 %v125
    %v158 = vunpack.c.l.b16 %v126
    %v159 = vpack.c.b16 %v144, %v143
    %v160 = vpack.c.b16 %v146, %v145
    %v161 = vpack.c.b16 %v148, %v147
    %v162 = vpack.c.b16 %v150, %v149
    %v163 = vpack.c.b16 %v152, %v151
    %v164 = vpack.c.b16 %v154, %v153
    %v165 = vpack.c.b16 %v156, %v155
    %v166 = vpack.c.b16 %v158, %v157
    %175 = vmatprep.subr.bf16.mxu0 0
    %176 = vmatpush1.bf16.msra.mxu0 %v159
    %177 = vmatprep.subr.bf16.mxu0 0
    %178 = vmatpush1.bf16.msra.mxu0 %v160
    %179 = vmatprep.subr.bf16.mxu0 0
    %180 = vmatpush1.bf16.msra.mxu0 %v161
    %181 = vmatprep.subr.bf16.mxu0 0
    %182 = vmatpush1.bf16.msra.mxu0 %v162
    %183 = vmatprep.subr.bf16.mxu0 0
    %184 = vmatpush1.bf16.msra.mxu0 %v163
    %185 = vmatprep.subr.bf16.mxu0 0
    %186 = vmatpush1.bf16.msra.mxu0 %v164
    %187 = vmatprep.subr.bf16.mxu0 0
    %188 = vmatpush1.bf16.msra.mxu0 %v165
    %189 = vmatprep.subr.bf16.mxu0 0
    %190 = vmatpush1.bf16.msra.mxu0 %v166
    %191 = vmatprep.subr.bf16.mxu0 0
    %192 = vmatpush1.bf16.msra.mxu0 0
    %193 = vmatprep.subr.bf16.mxu0 0
    %194 = vmatpush1.bf16.msra.mxu0 0
    %195 = vmatprep.subr.bf16.mxu0 0
    %196 = vmatpush1.bf16.msra.mxu0 0
    %197 = vmatprep.subr.bf16.mxu0 0
    %198 = vmatpush1.bf16.msra.mxu0 0
    %199 = vmatprep.subr.bf16.mxu0 0
    %200 = vmatpush1.bf16.msra.mxu0 0
    %201 = vmatprep.subr.bf16.mxu0 0
    %202 = vmatpush1.bf16.msra.mxu0 0
    %203 = vmatprep.subr.bf16.mxu0 0
    %204 = vmatpush1.bf16.msra.mxu0 0
    %205 = vmatprep.subr.bf16.mxu0 0
    %206 = vmatpush1.bf16.msra.mxu0 0
    %207 = vmatprep.mubr.bf16.mxu0 0
    %208 = vmatmul.mubr.bf16.gmra.mrb[0].mxu0 %v109
    %v209 = vpop.f32.mrb[0].mxu0
    %v210 = vadd.f32 0.0, %v209
    %v211 = vpop.f32.mrb[0].mxu0
    %v212 = vpop.f32.mrb[0].mxu0
    %v213 = vpop.f32.mrb[0].mxu0
    %214 = vdwg.mxu0
    %v215 = vadd.f32 %v110, %v210
    %vm216 = vcmask 64512
    %217 = vst.msk [vmem:[#allocation2] sm:$0xff] %vm216, %v215
    // Predicated region
    $region30: #{tpu_custom_call.1} parent=1 // pred_check
      %p218 = pneg %p25
    $region31: #{tpu_custom_call.1} parent=1 // pred_check_branch
      %220 = sbr.rel (%p218) target = $region33
    $region32: #{tpu_custom_call.1} parent=1 // pred_region
      %v221 = vld [vmem:[#allocation2] sm:$0xff]
      %v222 = vld [vmem:[%s5] sm:$0x1]
      %v224 = vlaneseq
      %v225 = vshrl.u32 %v224, 7
      %v226 = vsub.s32 0, %v225
      %v227 = vrot.slane %v222, %v226
      %v229 = vadd.f32 %v221, %v227
      %230 = vst.msk [vmem:[#allocation3] sm:$0xff] %vm216, %v229
    $region33: #{tpu_custom_call.1} parent=1 // pred_fallthru
      _
    // Predicated region
    $region34: #{tpu_custom_call.1} parent=1 // pred_check
      _
    $region35: #{tpu_custom_call.1} parent=1 // pred_check_branch
      %232 = sbr.rel (0) target = $region37
    $region36: #{tpu_custom_call.1} parent=1 // pred_region
      %s234 = ssub.s32 128, 128
      %235 = vsyncadd [#allocation4], %s234
      %s237 = sshll.u32 [#allocation3], 4
      %s238 = int_to_ptr.vmem [resolvable:$true] %s237
      %240 = dma.vmem_to_hbm [thread:$0]  %s238, 128, %s6, [#allocation4]
    $region37: #{tpu_custom_call.1} parent=1 // pred_fallthru
      _
    // Predicated region
    $region38: #{tpu_custom_call.1} parent=1 // pred_check
      _
    $region39: #{tpu_custom_call.1} parent=1 // pred_check_branch
      %242 = sbr.rel (0) target = $region41
    $region40: #{tpu_custom_call.1} parent=1 // pred_region
      %243 = dma.done [#allocation4], 128
    $region41: #{tpu_custom_call.1} parent=1 // pred_fallthru
      _
    %244 = vsyncpa [#allocation4], 1

</llo_original>
